<compile_context>
chip_gen: v6e
topology: v6e:2x2x1
jax: 0.10.0
libtpu: 0.0.40
codegen_flags: <defaults>
</compile_context>

<pallas_src>
import functools
import math

import jax
import jax.numpy as jnp
from jax.experimental import pallas as pl
from jax.experimental.pallas import tpu as pltpu


# ----------------------------------------------------------------------------
# Per-generation sizing (v5e/v6e: 128 MiB VMEM; v7x: 64 MiB per TensorCore)
# ----------------------------------------------------------------------------
def _tpu_vmem_bytes():
    try:
        info = pltpu.get_tpu_info()
    except Exception:
        return 64 * 1024 * 1024
    for attr in ("vmem_capacity_bytes", "vmem_size_bytes", "vmem_bytes"):
        v = getattr(info, attr, None)
        if isinstance(v, int) and v > 0:
            return v
    return 64 * 1024 * 1024


_VMEM_CAP_BYTES = _tpu_vmem_bytes()
if _VMEM_CAP_BYTES >= 100 * 1024 * 1024:      # v5e / v6e
    VMEM_LIMIT = 96 * 1024 * 1024
    TM_CAP = 1024                             # v6e roofline crossover ~700 rows
else:                                         # v7x (64 MiB / TC)
    VMEM_LIMIT = 48 * 1024 * 1024
    TM_CAP = 512                              # v7x crossover ~310 rows, VMEM-capped


def _pick_m_tile(M, cap):
    """Largest divisor of M that is <= cap (prefer multiples of 8)."""
    if M <= cap:
        return M
    best = 0
    for t in range(8, cap + 1, 8):
        if M % t == 0:
            best = t
    if best:
        return best
    for t in range(cap, 0, -1):
        if M % t == 0:
            return t
    return M


# ----------------------------------------------------------------------------
# Kernel 1: dense  y = act(x @ W + b)   — weight fully VMEM-resident, tile only M
# ----------------------------------------------------------------------------
def _dense_kernel(x_ref, w_ref, b_ref, o_ref, *, activation):
    y = jnp.dot(x_ref[...], w_ref[...], preferred_element_type=jnp.float32)
    y = y + b_ref[...].astype(jnp.float32)
    if activation == "gelu":
        # TODO(synk): BERT uses exact erf-GELU; tanh approx keeps it on the EUP.
        y = jax.nn.gelu(y, approximate=True)
    elif activation == "tanh":
        y = jnp.tanh(y)
    o_ref[...] = y.astype(o_ref.dtype)


def dense(x, w, b, activation=None, out_dtype=jnp.bfloat16):
    """x: (M, K) bf16, w: (K, N) bf16, b: (N,) f32 -> (M, N) out_dtype."""
    M, K = x.shape
    Kw, N = w.shape
    assert K == Kw
    tm = _pick_m_tile(M, TM_CAP)
    assert M % tm == 0
    return pl.pallas_call(
        functools.partial(_dense_kernel, activation=activation),
        out_shape=jax.ShapeDtypeStruct((M, N), out_dtype),
        grid_spec=pltpu.PrefetchScalarGridSpec(
            num_scalar_prefetch=0,
            grid=(M // tm,),
            in_specs=[
                pl.BlockSpec((tm, K), lambda i: (i, 0)),
                pl.BlockSpec((K, N), lambda i: (0, 0)),   # resident weight
                pl.BlockSpec((1, N), lambda i: (0, 0)),
            ],
            out_specs=pl.BlockSpec((tm, N), lambda i: (i, 0)),
        ),
        compiler_params=pltpu.CompilerParams(
            dimension_semantics=("parallel",),
            vmem_limit_bytes=VMEM_LIMIT,
        ),
    )(x, w, b.reshape(1, N))


# ----------------------------------------------------------------------------
# Kernel 2: dense + residual add + LayerNorm (BERT eps=1e-12), weight resident
# ----------------------------------------------------------------------------
def _dense_add_ln_kernel(x_ref, w_ref, b_ref, r_ref, g_ref, beta_ref, o_ref, *, eps):
    y = jnp.dot(x_ref[...], w_ref[...], preferred_element_type=jnp.float32)
    y = y + b_ref[...].astype(jnp.float32) + r_ref[...].astype(jnp.float32)
    mu = jnp.mean(y, axis=-1, keepdims=True)
    var = jnp.mean(jnp.square(y - mu), axis=-1, keepdims=True)
    y = (y - mu) * jax.lax.rsqrt(var + eps)
    y = y * g_ref[...].astype(jnp.float32) + beta_ref[...].astype(jnp.float32)
    o_ref[...] = y.astype(o_ref.dtype)


def dense_add_layernorm(x, w, b, residual, gamma, beta, eps=1e-12,
                        out_dtype=jnp.bfloat16):
    """LayerNorm(x @ W + b + residual): x (M,K), w (K,H), residual (M,H)."""
    M, K = x.shape
    Kw, H = w.shape
    assert K == Kw and residual.shape == (M, H)
    tm = _pick_m_tile(M, TM_CAP)
    assert M % tm == 0
    return pl.pallas_call(
        functools.partial(_dense_add_ln_kernel, eps=eps),
        out_shape=jax.ShapeDtypeStruct((M, H), out_dtype),
        grid_spec=pltpu.PrefetchScalarGridSpec(
            num_scalar_prefetch=0,
            grid=(M // tm,),
            in_specs=[
                pl.BlockSpec((tm, K), lambda i: (i, 0)),
                pl.BlockSpec((K, H), lambda i: (0, 0)),   # resident weight
                pl.BlockSpec((1, H), lambda i: (0, 0)),
                pl.BlockSpec((tm, H), lambda i: (i, 0)),  # residual
                pl.BlockSpec((1, H), lambda i: (0, 0)),
                pl.BlockSpec((1, H), lambda i: (0, 0)),
            ],
            out_specs=pl.BlockSpec((tm, H), lambda i: (i, 0)),
        ),
        compiler_params=pltpu.CompilerParams(
            dimension_semantics=("parallel",),
            vmem_limit_bytes=VMEM_LIMIT,
        ),
    )(x, w, b.reshape(1, H), residual, gamma.reshape(1, H), beta.reshape(1, H))


# ----------------------------------------------------------------------------
# Kernel 3: residual add + LayerNorm (embeddings)
# ----------------------------------------------------------------------------
def _add_ln_kernel(x_ref, r_ref, g_ref, b_ref, o_ref, *, eps):
    y = x_ref[...].astype(jnp.float32) + r_ref[...].astype(jnp.float32)
    mu = jnp.mean(y, axis=-1, keepdims=True)
    var = jnp.mean(jnp.square(y - mu), axis=-1, keepdims=True)
    y = (y - mu) * jax.lax.rsqrt(var + eps)
    o_ref[...] = (y * g_ref[...] + b_ref[...]).astype(o_ref.dtype)


def add_layernorm(x, residual, gamma, beta, eps=1e-12, out_dtype=jnp.bfloat16):
    M, H = x.shape
    tm = _pick_m_tile(M, TM_CAP)
    assert M % tm == 0
    return pl.pallas_call(
        functools.partial(_add_ln_kernel, eps=eps),
        out_shape=jax.ShapeDtypeStruct((M, H), out_dtype),
        grid_spec=pltpu.PrefetchScalarGridSpec(
            num_scalar_prefetch=0,
            grid=(M // tm,),
            in_specs=[
                pl.BlockSpec((tm, H), lambda i: (i, 0)),
                pl.BlockSpec((tm, H), lambda i: (i, 0)),
                pl.BlockSpec((1, H), lambda i: (0, 0)),
                pl.BlockSpec((1, H), lambda i: (0, 0)),
            ],
            out_specs=pl.BlockSpec((tm, H), lambda i: (i, 0)),
        ),
        compiler_params=pltpu.CompilerParams(
            dimension_semantics=("parallel",),
            vmem_limit_bytes=VMEM_LIMIT,
        ),
    )(x, residual, gamma.reshape(1, H), beta.reshape(1, H))


# ----------------------------------------------------------------------------
# Kernel 4: attention straight out of the fused QKV activation.
# Q/K/V are column blocks of the (B,S,3H) qkv tensor (offsets 0, H, 2H); the
# context is written back directly in (B,S,H) layout. Mask is per-batch (B,1,S).
# ----------------------------------------------------------------------------
def _attn_kernel(q_ref, k_ref, v_ref, m_ref, o_ref, *, heads_per_block, head_dim,
                 scale):
    qb = q_ref[0]                     # (S, hb*Dh) bf16
    kb = k_ref[0]
    vb = v_ref[0]
    mask = m_ref[0]                   # (1, S) f32 additive mask (0 / -10000)
    outs = []
    for h in range(heads_per_block):  # static unroll; heads are 64-lane column groups
        lo = h * head_dim
        hi = lo + head_dim
        q = qb[:, lo:hi] * scale      # fold 1/sqrt(Dh) into Q (cheaper than scaling S x S)
        k = kb[:, lo:hi]
        v = vb[:, lo:hi]
        s = jnp.dot(q, k.T, preferred_element_type=jnp.float32)     # (S, S)
        s = s + mask
        s = s - jnp.max(s, axis=-1, keepdims=True)
        p = jnp.exp(s)
        p = p * pl.reciprocal(jnp.sum(p, axis=-1, keepdims=True), approx=True)
        o = jnp.dot(p.astype(vb.dtype), v, preferred_element_type=jnp.float32)
        outs.append(o.astype(o_ref.dtype))
    o_ref[0] = jnp.concatenate(outs, axis=-1)        # lane-dense (S, hb*Dh) store


def _pick_heads_per_block(num_heads, head_dim):
    # Cap at 4 heads/step: keeps (hb,S,S) score scratch VMEM-safe on v7x at S=512.
    for hb in (4, 2, 1, num_heads):
        if num_heads % hb == 0 and (hb * head_dim) % 128 == 0:
            return hb
    return num_heads


def attention(qkv, add_mask, *, num_heads, head_dim, scale):
    """qkv: (B, S, 3H) bf16 (columns = [Q | K | V], head-major);
    add_mask: (B, 1, S) f32 additive -> context (B, S, H) bf16."""
    B, S, threeH = qkv.shape
    H = num_heads * head_dim
    assert threeH == 3 * H
    hb = _pick_heads_per_block(num_heads, head_dim)
    assert (hb * head_dim) % 128 == 0, "head block width must be lane-aligned"
    G = num_heads // hb
    bw = hb * head_dim
    return pl.pallas_call(
        functools.partial(_attn_kernel, heads_per_block=hb, head_dim=head_dim,
                          scale=scale),
        out_shape=jax.ShapeDtypeStruct((B, S, H), qkv.dtype),
        grid_spec=pltpu.PrefetchScalarGridSpec(
            num_scalar_prefetch=0,
            grid=(B, G),
            in_specs=[
                pl.BlockSpec((1, S, bw), lambda b, g: (b, 0, g)),            # Q
                pl.BlockSpec((1, S, bw), lambda b, g, G=G: (b, 0, g + G)),   # K
                pl.BlockSpec((1, S, bw), lambda b, g, G=G: (b, 0, g + 2 * G)),  # V
                pl.BlockSpec((1, 1, S), lambda b, g: (b, 0, 0)),             # mask
            ],
            out_specs=pl.BlockSpec((1, S, bw), lambda b, g: (b, 0, g)),
        ),
        compiler_params=pltpu.CompilerParams(
            dimension_semantics=("parallel", "parallel"),
            vmem_limit_bytes=VMEM_LIMIT,
        ),
    )(qkv, qkv, qkv, add_mask)


# ----------------------------------------------------------------------------
# Kernel 5: pooler (dense + tanh) fused with classifier Linear(768, 1).
# The N=1 classifier is a lane reduction (no 1-lane-wide MXU matmul).
# ----------------------------------------------------------------------------
def _pooler_cls_kernel(x_ref, wp_ref, bp_ref, wc_ref, bc_ref, o_ref):
    pooled = jnp.dot(x_ref[...], wp_ref[...], preferred_element_type=jnp.float32)
    pooled = jnp.tanh(pooled + bp_ref[...].astype(jnp.float32))
    w = wc_ref[...].astype(jnp.float32)                         # (1, H)
    logits = jnp.sum(pooled * w, axis=-1, keepdims=True)        # (B, 1)
    o_ref[...] = (logits + bc_ref[...].astype(jnp.float32)).astype(o_ref.dtype)


def pooler_classifier(cls, wp, bp, wc, bc):
    """cls: (B, H) bf16; wp: (H, H); wc: (1, H) -> logits (B, 1) f32."""
    B, H = cls.shape
    return pl.pallas_call(
        _pooler_cls_kernel,
        out_shape=jax.ShapeDtypeStruct((B, 1), jnp.float32),
        grid_spec=pltpu.PrefetchScalarGridSpec(
            num_scalar_prefetch=0,
            grid=(1,),
            in_specs=[
                pl.BlockSpec((B, H), lambda i: (0, 0)),
                pl.BlockSpec((H, H), lambda i: (0, 0)),
                pl.BlockSpec((1, H), lambda i: (0, 0)),
                pl.BlockSpec((1, H), lambda i: (0, 0)),
                pl.BlockSpec((1, 1), lambda i: (0, 0)),
            ],
            out_specs=pl.BlockSpec((B, 1), lambda i: (0, 0)),
        ),
        compiler_params=pltpu.CompilerParams(
            dimension_semantics=("arbitrary",),
            vmem_limit_bytes=VMEM_LIMIT,
        ),
    )(cls, wp, bp.reshape(1, H), wc, bc.reshape(1, 1))


# ----------------------------------------------------------------------------
# Parameter init (synthetic, deterministic) -- weights bf16, biases/LN f32
# ----------------------------------------------------------------------------
def init_params(key, cfg):
    H, I, L = cfg["hidden"], cfg["intermediate"], cfg["layers"]
    keys = iter(jax.random.split(key, 8 + 4 * L))

    def nrm(shape, dtype=jnp.bfloat16):
        return (0.02 * jax.random.normal(next(keys), shape)).astype(dtype)

    params = {
        "word_emb": nrm((cfg["vocab"], H), jnp.float32),
        "pos_emb": nrm((cfg["max_pos"], H), jnp.float32),
        "type_emb": nrm((cfg["type_vocab"], H), jnp.float32),
        "emb_ln_g": jnp.ones((H,), jnp.float32),
        "emb_ln_b": jnp.zeros((H,), jnp.float32),
        "pooler_w": nrm((H, H)),
        "pooler_b": jnp.zeros((H,), jnp.float32),
        "cls_w": nrm((1, H)),                 # nn.Linear(768, 1).weight has shape (1, 768)
        "cls_b": jnp.zeros((1,), jnp.float32),
        "layers": [],
    }
    for _ in range(L):
        params["layers"].append({
            # fused QKV weight, column order [Q | K | V], each section head-major
            "wqkv": nrm((H, 3 * H)), "bqkv": jnp.zeros((3 * H,), jnp.float32),
            "wo": nrm((H, H)), "bo": jnp.zeros((H,), jnp.float32),
            "ln1_g": jnp.ones((H,), jnp.float32),
            "ln1_b": jnp.zeros((H,), jnp.float32),
            "wi": nrm((H, I)), "bi": jnp.zeros((I,), jnp.float32),
            "wo2": nrm((I, H)), "bo2": jnp.zeros((H,), jnp.float32),
            "ln2_g": jnp.ones((H,), jnp.float32),
            "ln2_b": jnp.zeros((H,), jnp.float32),
        })
    return params


# ----------------------------------------------------------------------------
# Forward pass: BertBinaryClassifier.forward(tokens, masks)
# ----------------------------------------------------------------------------
def bert_binary_classifier(params, tokens, masks, cfg):
    B, S = tokens.shape
    H, nH, Dh = cfg["hidden"], cfg["heads"], cfg["head_dim"]
    M = B * S

    # --- embeddings (gather is XLA glue; add + layernorm fused in Pallas) ---
    word = jnp.take(params["word_emb"], tokens, axis=0)             # (B, S, H) f32
    pos = params["pos_emb"][:S]                                     # (S, H)
    typ = params["type_emb"][0]                                     # (H,) token_type_ids == 0
    rest = jnp.broadcast_to(pos[None] + typ[None, None], (B, S, H))
    x = add_layernorm(word.reshape(M, H), rest.reshape(M, H),
                      params["emb_ln_g"], params["emb_ln_b"])       # (M, H) bf16

    # --- extended attention mask: (1 - mask) * -10000, per batch only ---
    add_mask = ((1.0 - masks.astype(jnp.float32)) * -10000.0).reshape(B, 1, S)

    scale = 1.0 / math.sqrt(Dh)

    # --- transformer layers (dropout is identity at inference) ---
    for lyr in params["layers"]:
        qkv = dense(x, lyr["wqkv"], lyr["bqkv"])                    # (M, 3H) bf16
        ctx = attention(qkv.reshape(B, S, 3 * H), add_mask,
                        num_heads=nH, head_dim=Dh, scale=scale)     # (B, S, H) bf16
        # attn output projection + residual + LN1 fused
        x = dense_add_layernorm(ctx.reshape(M, H), lyr["wo"], lyr["bo"],
                                x, lyr["ln1_g"], lyr["ln1_b"])
        inter = dense(x, lyr["wi"], lyr["bi"], activation="gelu")   # FFN up + GELU
        # FFN down projection + residual + LN2 fused
        x = dense_add_layernorm(inter, lyr["wo2"], lyr["bo2"],
                                x, lyr["ln2_g"], lyr["ln2_b"])

    # --- pooler (tanh) + the module's nn.Linear(768, 1), fused in one kernel ---
    # TODO(synk): CLS extraction is a tiny XLA slice; could be folded into the pooler BlockSpec.
    cls = x.reshape(B, S, H)[:, 0, :]                               # (B, H) bf16
    logits = pooler_classifier(cls, params["pooler_w"], params["pooler_b"],
                               params["cls_w"], params["cls_b"])    # (B, 1) f32
    return logits


# ----------------------------------------------------------------------------
if __name__ == "__main__":
    cfg = dict(vocab=1000, hidden=768, heads=12, head_dim=64,
               intermediate=3072, layers=2, max_pos=64, type_vocab=2)

    key = jax.random.PRNGKey(0)
    pkey, tkey = jax.random.split(key)
    params = init_params(pkey, cfg)

    B, S = 2, 8
    tokens = jax.random.randint(tkey, (B, S), 0, cfg["vocab"], dtype=jnp.int32)
    masks = jnp.ones((B, S), dtype=jnp.float32)

    out = bert_binary_classifier(params, tokens, masks, cfg)
    out = jax.block_until_ready(out)
    assert out.shape == (B, 1) and out.dtype == jnp.float32
    print("KERNEL_OK")
</pallas_src>

<mosaic_0001>
module attributes {stable_mosaic.version = 11 : i64} {
  func.func @_add_ln_kernel(%arg0: i32, %arg1: memref<16x768xf32, #tpu.memory_space<vmem>>, %arg2: memref<16x768xf32, #tpu.memory_space<vmem>>, %arg3: memref<1x768xf32, #tpu.memory_space<vmem>>, %arg4: memref<1x768xf32, #tpu.memory_space<vmem>>, %arg5: memref<16x768xbf16, #tpu.memory_space<vmem>>) attributes {dimension_semantics = [#tpu.dimension_semantics<parallel>], iteration_bounds = array<i64: 1>, scalar_prefetch = 0 : i64, scratch_operands = 0 : i64, tpu.core_type = #tpu.core_type<tc>, window_params = [{transform_indices = @transform_0, window_bounds = array<i64: 16, 768>}, {transform_indices = @transform_1, window_bounds = array<i64: 16, 768>}, {pipeline_mode = #tpu.pipeline_mode<synchronous>, transform_indices = @transform_2, window_bounds = array<i64: 1, 768>}, {pipeline_mode = #tpu.pipeline_mode<synchronous>, transform_indices = @transform_3, window_bounds = array<i64: 1, 768>}, {transform_indices = @transform_4, window_bounds = array<i64: 16, 768>}]} {
    %c0 = arith.constant 0 : index
    %c0_0 = arith.constant 0 : index
    %0 = vector.load %arg1[%c0, %c0_0] : memref<16x768xf32, #tpu.memory_space<vmem>>, vector<16x768xf32>
    %c0_1 = arith.constant 0 : index
    %c0_2 = arith.constant 0 : index
    %1 = vector.load %arg2[%c0_1, %c0_2] : memref<16x768xf32, #tpu.memory_space<vmem>>, vector<16x768xf32>
    %2 = arith.addf %0, %1 : vector<16x768xf32>
    %cst = arith.constant dense<0.000000e+00> : vector<16xf32>
    %3 = vector.multi_reduction <add>, %2, %cst [1] : vector<16x768xf32> to vector<16xf32>
    %4 = vector.shape_cast %3 : vector<16xf32> to vector<16x1xf32>
    %cst_3 = arith.constant 7.680000e+02 : f32
    %5 = vector.broadcast %cst_3 : f32 to vector<16x1xf32>
    %6 = arith.divf %4, %5 : vector<16x1xf32>
    %7 = vector.broadcast %6 : vector<16x1xf32> to vector<16x768xf32>
    %8 = arith.subf %2, %7 : vector<16x768xf32>
    %9 = arith.mulf %8, %8 : vector<16x768xf32>
    %cst_4 = arith.constant dense<0.000000e+00> : vector<16xf32>
    %10 = vector.multi_reduction <add>, %9, %cst_4 [1] : vector<16x768xf32> to vector<16xf32>
    %11 = vector.shape_cast %10 : vector<16xf32> to vector<16x1xf32>
    %cst_5 = arith.constant 7.680000e+02 : f32
    %12 = vector.broadcast %cst_5 : f32 to vector<16x1xf32>
    %13 = arith.divf %11, %12 : vector<16x1xf32>
    %14 = vector.broadcast %6 : vector<16x1xf32> to vector<16x768xf32>
    %15 = arith.subf %2, %14 : vector<16x768xf32>
    %cst_6 = arith.constant 9.99999996E-13 : f32
    %16 = vector.broadcast %cst_6 : f32 to vector<16x1xf32>
    %17 = arith.addf %13, %16 : vector<16x1xf32>
    %18 = math.rsqrt %17 : vector<16x1xf32>
    %19 = vector.broadcast %18 : vector<16x1xf32> to vector<16x768xf32>
    %20 = arith.mulf %15, %19 : vector<16x768xf32>
    %c0_7 = arith.constant 0 : index
    %c0_8 = arith.constant 0 : index
    %21 = vector.load %arg3[%c0_7, %c0_8] : memref<1x768xf32, #tpu.memory_space<vmem>>, vector<1x768xf32>
    %22 = vector.broadcast %21 : vector<1x768xf32> to vector<16x768xf32>
    %23 = arith.mulf %20, %22 : vector<16x768xf32>
    %c0_9 = arith.constant 0 : index
    %c0_10 = arith.constant 0 : index
    %24 = vector.load %arg4[%c0_9, %c0_10] : memref<1x768xf32, #tpu.memory_space<vmem>>, vector<1x768xf32>
    %25 = vector.broadcast %24 : vector<1x768xf32> to vector<16x768xf32>
    %26 = arith.addf %23, %25 : vector<16x768xf32>
    %27 = arith.truncf %26 : vector<16x768xf32> to vector<16x768xbf16>
    %c0_11 = arith.constant 0 : index
    %c0_12 = arith.constant 0 : index
    %28 = vector.load %arg5[%c0_11, %c0_12] : memref<16x768xbf16, #tpu.memory_space<vmem>>, vector<16x768xbf16>
    tpu.vector_store %arg5[%c0_11, %c0_12], %27 {strides = array<i32>} : memref<16x768xbf16, #tpu.memory_space<vmem>>, vector<16x768xbf16>,
    return
  }
  func.func @transform_0(%arg0: i32) -> (i32, i32) {
    %c0_i32 = arith.constant 0 : i32
    %c0_i32_0 = arith.constant 0 : i32
    return %arg0, %c0_i32 : i32, i32
  }
  func.func @transform_1(%arg0: i32) -> (i32, i32) {
    %c0_i32 = arith.constant 0 : i32
    %c0_i32_0 = arith.constant 0 : i32
    return %arg0, %c0_i32 : i32, i32
  }
  func.func @transform_2(%arg0: i32) -> (i32, i32) {
    %c0_i32 = arith.constant 0 : i32
    %c0_i32_0 = arith.constant 0 : i32
    %c0_i32_1 = arith.constant 0 : i32
    return %c0_i32, %c0_i32_0 : i32, i32
  }
  func.func @transform_3(%arg0: i32) -> (i32, i32) {
    %c0_i32 = arith.constant 0 : i32
    %c0_i32_0 = arith.constant 0 : i32
    %c0_i32_1 = arith.constant 0 : i32
    return %c0_i32, %c0_i32_0 : i32, i32
  }
  func.func @transform_4(%arg0: i32) -> (i32, i32) {
    %c0_i32 = arith.constant 0 : i32
    %c0_i32_0 = arith.constant 0 : i32
    return %arg0, %c0_i32 : i32, i32
  }
}

</mosaic_0001>

<llo_original>
// kernel: tpu_custom_call.1
$region0: #{tpu_custom_call.1}
  #allocation0 [shape = 'u32[]', space=smem, size = 0x4, offset = 0x4, fixed_abs, tag = 'smem constant byte address 0x4 - core index']
  #allocation1 [shape = 'u32[144,128]{1,0:T(1,128)}', space=vmem, size = 0x12000, scoped, tag = 'internal scratch']
  %s0 = inlined_call_operand.hbm [shape: f32[16,768], index: 0, kind: input, shape index: {}]
  %s1 = inlined_call_operand.hbm [shape: f32[16,768], index: 1, kind: input, shape index: {}]
  %s2 = inlined_call_operand.hbm [shape: f32[1,768], index: 2, kind: input, shape index: {}]
  %s3 = inlined_call_operand.hbm [shape: f32[1,768], index: 3, kind: input, shape index: {}]
  %s4 = inlined_call_operand.hbm [shape: bf16[16,768], index: 4, kind: output, shape index: {}]
  %s5 = sld [smem:[#allocation0]]
  $region42: #{tpu_custom_call.1} parent=0
    _
  %s7 = ssub.s32 1, %s5
  %s8 = scalar_select 0, %s7, %s5
  $region1: #{tpu_custom_call.1} parent=0
    #allocation2 [shape = 'u8[49152]{0}', space=vmem, size = 0xc000, scoped, tag = 'input window, operand 0, single buffered']
    #allocation3 [shape = 's32[1]{0}', space=sflag, size = 0x4, scoped, tag = 'scoped memory for tpu_custom_call.1']
    #allocation4 [shape = 's32[1]{0}', space=sflag, size = 0x4, scoped, tag = 'scoped memory for tpu_custom_call.1']
    #allocation5 [shape = 'u8[49152]{0}', space=vmem, size = 0xc000, scoped, tag = 'input window, operand 1, single buffered']
    #allocation6 [shape = 's32[1]{0}', space=sflag, size = 0x4, scoped, tag = 'scoped memory for tpu_custom_call.1']
    #allocation7 [shape = 'u8[3072]{0}', space=vmem, size = 0xc00, scoped, tag = 'input window, operand 2, single buffered']
    #allocation8 [shape = 'u8[3072]{0}', space=vmem, size = 0xc00, scoped, tag = 'input window, operand 3, single buffered']
    #allocation9 [shape = 's32[1]{0}', space=sflag, size = 0x4, scoped, tag = 'scoped memory for tpu_custom_call.1']
    #allocation10 [shape = 'u8[24576]{0}', space=vmem, size = 0x6000, scoped, tag = 'output window, operand 0, single buffered']
    %9 = vsyncpa [#allocation3], 0
    %10 = vsyncpa [#allocation6], 0
    %11 = vsyncpa [#allocation9], 0
    %12 = vsyncpa [#allocation4], 0
    // Predicated region
    $region2: #{tpu_custom_call.1} parent=1 // pred_check
      _
    $region3: #{tpu_custom_call.1} parent=1 // pred_check_branch
      %14 = sbr.rel (0) target = $region5
    $region4: #{tpu_custom_call.1} parent=1 // pred_region
      %s16 = ssub.s32 1536, 1536
      %17 = vsyncadd [#allocation3], %s16
      %s18 = sshll.u32 [#allocation2], 4
      %s19 = int_to_ptr.vmem [resolvable:$true] %s18
      %24 = dma.hbm_to_vmem [thread:$0]  %s0, 1536, %s19, [#allocation3], 768, 768, 48
    $region5: #{tpu_custom_call.1} parent=1 // pred_fallthru
      _
    // Predicated region
    $region6: #{tpu_custom_call.1} parent=1 // pred_check
      _
    $region7: #{tpu_custom_call.1} parent=1 // pred_check_branch
      %26 = sbr.rel (0) target = $region9
    $region8: #{tpu_custom_call.1} parent=1 // pred_region
      %s28 = ssub.s32 1536, 1536
      %29 = vsyncadd [#allocation6], %s28
      %s30 = sshll.u32 [#allocation5], 4
      %s31 = int_to_ptr.vmem [resolvable:$true] %s30
      %36 = dma.hbm_to_vmem [thread:$0]  %s1, 1536, %s31, [#allocation6], 768, 768, 48
    $region9: #{tpu_custom_call.1} parent=1 // pred_fallthru
      _
    // Predicated region
    $region10: #{tpu_custom_call.1} parent=1 // pred_check
      _
    $region11: #{tpu_custom_call.1} parent=1 // pred_check_branch
      %38 = sbr.rel (0) target = $region13
    $region12: #{tpu_custom_call.1} parent=1 // pred_region
      %s40 = ssub.s32 96, 96
      %41 = vsyncadd [#allocation6], %s40
      %s43 = sshll.u32 [#allocation7], 4
      %s44 = int_to_ptr.vmem [resolvable:$true] %s43
      %46 = dma.hbm_to_vmem [thread:$0]  %s2, 96, %s44, [#allocation6]
    $region13: #{tpu_custom_call.1} parent=1 // pred_fallthru
      _
    // Predicated region
    $region14: #{tpu_custom_call.1} parent=1 // pred_check
      _
    $region15: #{tpu_custom_call.1} parent=1 // pred_check_branch
      %48 = sbr.rel (0) target = $region17
    $region16: #{tpu_custom_call.1} parent=1 // pred_region
      %s50 = ssub.s32 96, 96
      %51 = vsyncadd [#allocation9], %s50
      %s53 = sshll.u32 [#allocation8], 4
      %s54 = int_to_ptr.vmem [resolvable:$true] %s53
      %56 = dma.hbm_to_vmem [thread:$0]  %s3, 96, %s54, [#allocation9]
    $region17: #{tpu_custom_call.1} parent=1 // pred_fallthru
      _
    // Predicated region
    $region18: #{tpu_custom_call.1} parent=1 // pred_check
      _
    $region19: #{tpu_custom_call.1} parent=1 // pred_check_branch
      %58 = sbr.rel (0) target = $region21
    $region20: #{tpu_custom_call.1} parent=1 // pred_region
      %59 = dma.done [#allocation3], 1536
    $region21: #{tpu_custom_call.1} parent=1 // pred_fallthru
      _
    // Predicated region
    $region22: #{tpu_custom_call.1} parent=1 // pred_check
      _
    $region23: #{tpu_custom_call.1} parent=1 // pred_check_branch
      %61 = sbr.rel (0) target = $region25
    $region24: #{tpu_custom_call.1} parent=1 // pred_region
      %62 = dma.done [#allocation6], 1536
    $region25: #{tpu_custom_call.1} parent=1 // pred_fallthru
      _
    // Predicated region
    $region26: #{tpu_custom_call.1} parent=1 // pred_check
      _
    $region27: #{tpu_custom_call.1} parent=1 // pred_check_branch
      %64 = sbr.rel (0) target = $region29
    $region28: #{tpu_custom_call.1} parent=1 // pred_region
      %65 = dma.done [#allocation6], 96
    $region29: #{tpu_custom_call.1} parent=1 // pred_fallthru
      _
    // Predicated region
    $region30: #{tpu_custom_call.1} parent=1 // pred_check
      _
    $region31: #{tpu_custom_call.1} parent=1 // pred_check_branch
      %67 = sbr.rel (0) target = $region33
    $region32: #{tpu_custom_call.1} parent=1 // pred_region
      %68 = dma.done [#allocation9], 96
    $region33: #{tpu_custom_call.1} parent=1 // pred_fallthru
      _
    %v69 = vld [vmem:[#allocation2] sm:$0xff]
    %v70 = vld [vmem:[#allocation2 + $0x8] sm:$0xff]
    %v71 = vld [vmem:[#allocation2 + $0x10] sm:$0xff]
    %v72 = vld [vmem:[#allocation2 + $0x18] sm:$0xff]
    %v73 = vld [vmem:[#allocation2 + $0x20] sm:$0xff]
    %v74 = vld [vmem:[#allocation2 + $0x28] sm:$0xff]
    %v75 = vld [vmem:[#allocation2 + $0x30] sm:$0xff]
    %v76 = vld [vmem:[#allocation2 + $0x38] sm:$0xff]
    %v77 = vld [vmem:[#allocation2 + $0x40] sm:$0xff]
    %v78 = vld [vmem:[#allocation2 + $0x48] sm:$0xff]
    %v79 = vld [vmem:[#allocation2 + $0x50] sm:$0xff]
    %v80 = vld [vmem:[#allocation2 + $0x58] sm:$0xff]
    %v81 = vld [vmem:[#allocation5] sm:$0xff]
    %v82 = vld [vmem:[#allocation5 + $0x8] sm:$0xff]
    %v83 = vld [vmem:[#allocation5 + $0x10] sm:$0xff]
    %v84 = vld [vmem:[#allocation5 + $0x18] sm:$0xff]
    %v85 = vld [vmem:[#allocation5 + $0x20] sm:$0xff]
    %v86 = vld [vmem:[#allocation5 + $0x28] sm:$0xff]
    %v87 = vld [vmem:[#allocation5 + $0x30] sm:$0xff]
    %v88 = vld [vmem:[#allocation5 + $0x38] sm:$0xff]
    %v89 = vld [vmem:[#allocation5 + $0x40] sm:$0xff]
    %v90 = vld [vmem:[#allocation5 + $0x48] sm:$0xff]
    %v91 = vld [vmem:[#allocation5 + $0x50] sm:$0xff]
    %v92 = vld [vmem:[#allocation5 + $0x58] sm:$0xff]
    %v93 = vadd.f32 %v69, %v81
    %v94 = vadd.f32 %v70, %v82
    %v95 = vadd.f32 %v71, %v83
    %v96 = vadd.f32 %v72, %v84
    %v97 = vadd.f32 %v73, %v85
    %v98 = vadd.f32 %v74, %v86
    %v99 = vadd.f32 %v75, %v87
    %v100 = vadd.f32 %v76, %v88
    %v101 = vadd.f32 %v77, %v89
    %v102 = vadd.f32 %v78, %v90
    %v103 = vadd.f32 %v79, %v91
    %v104 = vadd.f32 %v80, %v92
    %v105 = vadd.f32 %v93, %v94
    %v106 = vadd.f32 %v105, %v95
    %v107 = vadd.f32 %v106, %v96
    %v108 = vadd.f32 %v107, %v97
    %v109 = vadd.f32 %v108, %v98
    %110 = vadd.xlane.f32.xlu0 %v109
    %v111 = vpop.xlane.xlu0 %110
    %v112 = vadd.f32 %v99, %v100
    %v113 = vadd.f32 %v112, %v101
    %v114 = vadd.f32 %v113, %v102
    %v115 = vadd.f32 %v114, %v103
    %v116 = vadd.f32 %v115, %v104
    %117 = vadd.xlane.f32.xlu0 %v116
    %v118 = vpop.xlane.xlu0 %117
    %v119 = vrcp.pop 768.0
    %v120 = vmul.f32 %v111, %v119
    %v121 = vmul.f32 %v118, %v119
    %v122 = vsub.f32 %v93, %v120
    %v123 = vsub.f32 %v94, %v120
    %v124 = vsub.f32 %v95, %v120
    %v125 = vsub.f32 %v96, %v120
    %v126 = vsub.f32 %v97, %v120
    %v127 = vsub.f32 %v98, %v120
    %v128 = vsub.f32 %v99, %v121
    %v129 = vsub.f32 %v100, %v121
    %v130 = vsub.f32 %v101, %v121
    %v131 = vsub.f32 %v102, %v121
    %v132 = vsub.f32 %v103, %v121
    %v133 = vsub.f32 %v104, %v121
    %v134 = vmul.f32 %v122, %v122
    %v135 = vmul.f32 %v123, %v123
    %v136 = vmul.f32 %v124, %v124
    %v137 = vmul.f32 %v125, %v125
    %v138 = vmul.f32 %v126, %v126
    %v139 = vmul.f32 %v127, %v127
    %v140 = vmul.f32 %v128, %v128
    %v141 = vmul.f32 %v129, %v129
    %v142 = vmul.f32 %v130, %v130
    %v143 = vmul.f32 %v131, %v131
    %v144 = vmul.f32 %v132, %v132
    %v145 = vmul.f32 %v133, %v133
    %v146 = vadd.f32 %v134, %v135
    %v147 = vadd.f32 %v146, %v136
    %v148 = vadd.f32 %v147, %v137
    %v149 = vadd.f32 %v148, %v138
    %v150 = vadd.f32 %v149, %v139
    %151 = vadd.xlane.f32.xlu0 %v150
    %v152 = vpop.xlane.xlu0 %151
    %v153 = vadd.f32 %v140, %v141
    %v154 = vadd.f32 %v153, %v142
    %v155 = vadd.f32 %v154, %v143
    %v156 = vadd.f32 %v155, %v144
    %v157 = vadd.f32 %v156, %v145
    %158 = vadd.xlane.f32.xlu0 %v157
    %v159 = vpop.xlane.xlu0 %158
    %v160 = vmul.f32 %v152, %v119
    %v161 = vmul.f32 %v159, %v119
    %v162 = vadd.f32 %v160, 1e-12
    %v163 = vadd.f32 %v161, 1e-12
    %v164 = vrsqrt.pop %v162
    %v165 = vrsqrt.pop %v163
    %v166 = vmul.f32 %v122, %v164
    %v167 = vmul.f32 %v123, %v164
    %v168 = vmul.f32 %v124, %v164
    %v169 = vmul.f32 %v125, %v164
    %v170 = vmul.f32 %v126, %v164
    %v171 = vmul.f32 %v127, %v164
    %v172 = vmul.f32 %v128, %v165
    %v173 = vmul.f32 %v129, %v165
    %v174 = vmul.f32 %v130, %v165
    %v175 = vmul.f32 %v131, %v165
    %v176 = vmul.f32 %v132, %v165
    %v177 = vmul.f32 %v133, %v165
    %v178 = vld [vmem:[#allocation7] sm:$0x3f]
    %v180 = vlaneseq
    %v181 = vshrl.u32 %v180, 7
    %v182 = vsub.s32 0, %v181
    %v183 = vrot.slane %v178, %v182
    %v184 = vlaneseq
    %v185 = vshrl.u32 %v184, 7
    %v186 = vsub.s32 1, %v185
    %v187 = vrot.slane %v178, %v186
    %v188 = vlaneseq
    %v189 = vshrl.u32 %v188, 7
    %v190 = vsub.s32 2, %v189
    %v191 = vrot.slane %v178, %v190
    %v192 = vlaneseq
    %v193 = vshrl.u32 %v192, 7
    %v194 = vsub.s32 3, %v193
    %v195 = vrot.slane %v178, %v194
    %v196 = vlaneseq
    %v197 = vshrl.u32 %v196, 7
    %v198 = vsub.s32 4, %v197
    %v199 = vrot.slane %v178, %v198
    %v200 = vlaneseq
    %v201 = vshrl.u32 %v200, 7
    %v202 = vsub.s32 5, %v201
    %v203 = vrot.slane %v178, %v202
    %v210 = vmul.f32 %v166, %v183
    %v211 = vmul.f32 %v167, %v187
    %v212 = vmul.f32 %v168, %v191
    %v213 = vmul.f32 %v169, %v195
    %v214 = vmul.f32 %v170, %v199
    %v215 = vmul.f32 %v171, %v203
    %v216 = vmul.f32 %v172, %v183
    %v217 = vmul.f32 %v173, %v187
    %v218 = vmul.f32 %v174, %v191
    %v219 = vmul.f32 %v175, %v195
    %v220 = vmul.f32 %v176, %v199
    %v221 = vmul.f32 %v177, %v203
    %v222 = vld [vmem:[#allocation8] sm:$0x3f]
    %v224 = vlaneseq
    %v225 = vshrl.u32 %v224, 7
    %v226 = vsub.s32 0, %v225
    %v227 = vrot.slane %v222, %v226
    %v228 = vlaneseq
    %v229 = vshrl.u32 %v228, 7
    %v230 = vsub.s32 1, %v229
    %v231 = vrot.slane %v222, %v230
    %v232 = vlaneseq
    %v233 = vshrl.u32 %v232, 7
    %v234 = vsub.s32 2, %v233
    %v235 = vrot.slane %v222, %v234
    %v236 = vlaneseq
    %v237 = vshrl.u32 %v236, 7
    %v238 = vsub.s32 3, %v237
    %v239 = vrot.slane %v222, %v238
    %v240 = vlaneseq
    %v241 = vshrl.u32 %v240, 7
    %v242 = vsub.s32 4, %v241
    %v243 = vrot.slane %v222, %v242
    %v244 = vlaneseq
    %v245 = vshrl.u32 %v244, 7
    %v246 = vsub.s32 5, %v245
    %v247 = vrot.slane %v222, %v246
    %v254 = vadd.f32 %v210, %v227
    %v255 = vadd.f32 %v211, %v231
    %v256 = vadd.f32 %v212, %v235
    %v257 = vadd.f32 %v213, %v239
    %v258 = vadd.f32 %v214, %v243
    %v259 = vadd.f32 %v215, %v247
    %v260 = vadd.f32 %v216, %v227
    %v261 = vadd.f32 %v217, %v231
    %v262 = vadd.f32 %v218, %v235
    %v263 = vadd.f32 %v219, %v239
    %v264 = vadd.f32 %v220, %v243
    %v265 = vadd.f32 %v221, %v247
    %v266 = vpack.c.bf16 %v260, %v254
    %v267 = vpack.c.bf16 %v261, %v255
    %v268 = vpack.c.bf16 %v262, %v256
    %v269 = vpack.c.bf16 %v263, %v257
    %v270 = vpack.c.bf16 %v264, %v258
    %v271 = vpack.c.bf16 %v265, %v259
    %v278 = vunpack.c.l.b16 %v266
    %v279 = vunpack.c.l.b16 %v267
    %v280 = vunpack.c.l.b16 %v268
    %v281 = vunpack.c.l.b16 %v269
    %v282 = vunpack.c.l.b16 %v270
    %v283 = vunpack.c.l.b16 %v271
    %v284 = vunpack.c.h.b16 %v266
    %v285 = vunpack.c.h.b16 %v267
    %v286 = vunpack.c.h.b16 %v268
    %v287 = vunpack.c.h.b16 %v269
    %v288 = vunpack.c.h.b16 %v270
    %v289 = vunpack.c.h.b16 %v271
    %v290 = vpack.c.b16 %v279, %v278
    %v291 = vpack.c.b16 %v281, %v280
    %v292 = vpack.c.b16 %v283, %v282
    %v293 = vpack.c.b16 %v285, %v284
    %v294 = vpack.c.b16 %v287, %v286
    %v295 = vpack.c.b16 %v289, %v288
    %302 = vst [vmem:[#allocation10] sm:$0xff] %v290
    %303 = vst [vmem:[#allocation10 + $0x8] sm:$0xff] %v291
    %304 = vst [vmem:[#allocation10 + $0x10] sm:$0xff] %v292
    %305 = vst [vmem:[#allocation10 + $0x18] sm:$0xff] %v293
    %306 = vst [vmem:[#allocation10 + $0x20] sm:$0xff] %v294
    %307 = vst [vmem:[#allocation10 + $0x28] sm:$0xff] %v295
    // Predicated region
    $region34: #{tpu_custom_call.1} parent=1 // pred_check
      _
    $region35: #{tpu_custom_call.1} parent=1 // pred_check_branch
      %309 = sbr.rel (0) target = $region37
    $region36: #{tpu_custom_call.1} parent=1 // pred_region
      %s311 = ssub.s32 768, 768
      %312 = vsyncadd [#allocation4], %s311
      %s313 = sshll.u32 [#allocation10], 4
      %s314 = int_to_ptr.vmem [resolvable:$true] %s313
      %319 = dma.vmem_to_hbm [thread:$0]  %s314, 768, %s4, [#allocation4], 384, 384, 24
    $region37: #{tpu_custom_call.1} parent=1 // pred_fallthru
      _
    // Predicated region
    $region38: #{tpu_custom_call.1} parent=1 // pred_check
      _
    $region39: #{tpu_custom_call.1} parent=1 // pred_check_branch
      %321 = sbr.rel (0) target = $region41
    $region40: #{tpu_custom_call.1} parent=1 // pred_region
      %322 = dma.done [#allocation4], 768
    $region41: #{tpu_custom_call.1} parent=1 // pred_fallthru
      _
    %323 = vsyncpa [#allocation3], 1
    %324 = vsyncpa [#allocation6], 1
    %325 = vsyncpa [#allocation9], 1
    %326 = vsyncpa [#allocation4], 1

</llo_original>
